<compile_context>
chip_gen: v5e
topology: v5e:2x2
jax: 0.10.0
libtpu: 0.0.40
codegen_flags: <defaults>
</compile_context>

<pallas_src>
import functools

import jax
import jax.numpy as jnp
from jax.experimental import pallas as pl
from jax.experimental.pallas import tpu as pltpu


def _round_up(x, m):
    return ((x + m - 1) // m) * m


# ----------------------------------------------------------------------------
# Kernel 1: tiled cross-entropy sum (per split), accumulated in VMEM scratch.
# ----------------------------------------------------------------------------
def _ce_sum_kernel(logits_ref, tgt_ref, partial_ref, acc_ref, *,
                   n_valid, tile_rows, tiles_per_split):
    s = pl.program_id(0)          # split ("parallel" axis -> per-core on v7x)
    i = pl.program_id(1)          # row-tile within the split ("arbitrary")

    @pl.when(i == 0)
    def _():
        acc_ref[...] = jnp.zeros_like(acc_ref)

    logits = logits_ref[...].astype(jnp.float32)          # (tile_rows, C_pad)
    tgt = tgt_ref[...]                                    # (tile_rows, 1) i32

    # numerically-stable logsumexp over the (lane-padded) class dim
    m = jnp.max(logits, axis=-1, keepdims=True)
    lse = jnp.log(jnp.sum(jnp.exp(logits - m), axis=-1, keepdims=True)) + m

    class_iota = jax.lax.broadcasted_iota(jnp.int32, logits.shape, 1)
    tgt_logit = jnp.sum(jnp.where(class_iota == tgt, logits, 0.0),
                        axis=-1, keepdims=True)

    per_row = lse - tgt_logit                             # -log p(target)

    # mask out padded rows (row padding added so the grid tiles evenly)
    row_iota = jax.lax.broadcasted_iota(jnp.int32, per_row.shape, 0)
    global_row = (s * tiles_per_split + i) * tile_rows + row_iota
    per_row = jnp.where(global_row < n_valid, per_row, 0.0)

    acc_ref[...] += jnp.sum(per_row, axis=0, keepdims=True)

    # single store per split (last step only)
    @pl.when(i == tiles_per_split - 1)
    def _():
        partial_ref[...] = acc_ref[...].reshape(1, 1, 1)


def pallas_cross_entropy_mean(logits_flat, targets_flat, *,
                              tile_rows=512, num_splits=2):
    """Mean cross-entropy over all rows of logits_flat (N, C), targets (N, 1)."""
    n, c = logits_flat.shape

    # lane-dense class dim; padded columns get a large negative value so they
    # never win the max and exp() underflows to 0 in the logsumexp.
    c_pad = max(128, _round_up(c, 128))
    tile_rows = min(tile_rows, _round_up(n, 16))          # mult of 16 (bf16-safe)
    tiles_total = pl.cdiv(n, tile_rows)
    tiles_per_split = pl.cdiv(tiles_total, num_splits)
    n_pad = num_splits * tiles_per_split * tile_rows

    logits_p = jnp.pad(logits_flat, ((0, n_pad - n), (0, c_pad - c)),
                       constant_values=-1e9)
    tgt_p = jnp.pad(targets_flat.astype(jnp.int32), ((0, n_pad - n), (0, 0)))

    kernel = functools.partial(_ce_sum_kernel, n_valid=n, tile_rows=tile_rows,
                               tiles_per_split=tiles_per_split)

    bytes_accessed = int(logits_p.size * logits_p.dtype.itemsize
                         + tgt_p.size * tgt_p.dtype.itemsize
                         + num_splits * 4)

    partials = pl.pallas_call(
        kernel,
        out_shape=jax.ShapeDtypeStruct((num_splits, 1, 1), jnp.float32),
        grid_spec=pltpu.PrefetchScalarGridSpec(
            num_scalar_prefetch=0,
            grid=(num_splits, tiles_per_split),
            in_specs=[
                pl.BlockSpec((tile_rows, c_pad),
                             lambda s, i: (s * tiles_per_split + i, 0)),
                pl.BlockSpec((tile_rows, 1),
                             lambda s, i: (s * tiles_per_split + i, 0)),
            ],
            out_specs=pl.BlockSpec((1, 1, 1), lambda s, i: (s, 0, 0)),
            scratch_shapes=[pltpu.VMEM((1, 1), jnp.float32)],
        ),
        compiler_params=pltpu.CompilerParams(
            dimension_semantics=("parallel", "arbitrary"),
            vmem_limit_bytes=32 * 1024 * 1024,
        ),
        cost_estimate=pl.CostEstimate(
            flops=int(6 * n_pad * c_pad),
            transcendentals=int(n_pad * c_pad),
            bytes_accessed=bytes_accessed,
        ),
    )(logits_p, tgt_p)

    return jnp.sum(partials) / n


# ----------------------------------------------------------------------------
# Kernel 2: L1 box loss on a lane-dense slab (tiny; single block).
# ----------------------------------------------------------------------------
def _l1_sum_kernel(pb_ref, tb_ref, out_ref):
    diff = jnp.abs(pb_ref[...].astype(jnp.float32) -
                   tb_ref[...].astype(jnp.float32))        # (R, 128)
    row_sum = jnp.sum(diff, axis=1, keepdims=True)
    out_ref[...] = jnp.sum(row_sum, axis=0, keepdims=True)


def pallas_l1_mean(pred_boxes, tgt_boxes):
    """Mean |pred - tgt| over all M*4 matched box coordinates."""
    m, d = pred_boxes.shape
    n_elem = m * d
    pad_len = max(1024, _round_up(max(n_elem, 1), 1024))   # 8 sublanes x 128 lanes

    def pack(x):
        flat = x.reshape(-1)
        flat = jnp.pad(flat, (0, pad_len - n_elem))        # zeros -> |diff| = 0
        return flat.reshape(pad_len // 128, 128)

    pb, tb = pack(pred_boxes), pack(tgt_boxes)

    total = pl.pallas_call(
        _l1_sum_kernel,
        out_shape=jax.ShapeDtypeStruct((1, 1), jnp.float32),
        grid=(1,),
        in_specs=[pl.BlockSpec(pb.shape, lambda i: (0, 0)),
                  pl.BlockSpec(tb.shape, lambda i: (0, 0))],
        out_specs=pl.BlockSpec((1, 1), lambda i: (0, 0)),
        compiler_params=pltpu.CompilerParams(
            dimension_semantics=("arbitrary",)),
    )(pb, tb)
    return total[0, 0] / max(n_elem, 1)


# ----------------------------------------------------------------------------
# SetCriterion: JAX port.  Ragged per-image gathers and the scatter that builds
# target_classes are glue (plain JAX); the loss reductions run in Pallas.
# ----------------------------------------------------------------------------
class SetCriterion:
    def __init__(self, matcher, num_classes):
        self.matcher = matcher
        self.num_classes = num_classes

    def _get_src_permutation_idx(self, indices):
        batch_idx = jnp.concatenate(
            [jnp.full(src.shape, i, dtype=jnp.int32)
             for i, (src, _) in enumerate(indices)])
        src_idx = jnp.concatenate([src for src, _ in indices]).astype(jnp.int32)
        return batch_idx, src_idx

    def forward(self, y_true, y_preds):
        indices = self.matcher(y_true, y_preds)
        src_logits = y_preds['labels']                    # (bs, Q, C) native dtype
        pred_boxes = y_preds['boxes']                     # (bs, Q, 4)
        bs, Q, C = src_logits.shape

        batch_idx, src_idx = self._get_src_permutation_idx(indices)

        # labels: scatter matched gt classes into a "no object"-filled grid
        target_classes_o = jnp.concatenate(
            [t['labels'][j.astype(jnp.int32)] for t, (_, j) in zip(y_true, indices)])
        target_classes = jnp.full((bs, Q), self.num_classes, dtype=jnp.int32)
        target_classes = target_classes.at[batch_idx, src_idx].set(
            target_classes_o.astype(jnp.int32))

        # boxes: gather matched predicted / ground-truth boxes
        target_boxes = jnp.concatenate(
            [t['boxes'][j.astype(jnp.int32)] for t, (_, j) in zip(y_true, indices)],
            axis=0)
        matched_pred = pred_boxes[batch_idx, src_idx]

        # NOTE: no .astype(f32) on logits here — stream native dtype, cast in-kernel.
        logits_flat = src_logits.reshape(bs * Q, C)
        tgt_flat = target_classes.reshape(bs * Q, 1)

        label_loss = pallas_cross_entropy_mean(logits_flat, tgt_flat)
        boxes_loss = pallas_l1_mean(matched_pred, target_boxes)
        return {'label_loss': label_loss, 'boxes_loss': boxes_loss}


# TODO(synk): Hungarian matching (the injected `matcher`) has no clean Pallas
# equivalent; a deterministic identity matcher is injected for this synthetic run.
def identity_matcher(y_true, y_preds):
    out = []
    for t in y_true:
        n = t['labels'].shape[0]
        idx = jnp.arange(n, dtype=jnp.int32)
        out.append((idx, idx))
    return out


if __name__ == "__main__":
    key = jax.random.PRNGKey(0)
    bs, Q, num_classes = 2, 8, 3
    C = num_classes + 1                 # logits include the no-object class
    n_targets = [3, 4]

    k1, k2, k3, k4 = jax.random.split(key, 4)
    logits = jax.random.normal(k1, (bs, Q, C), dtype=jnp.float32)
    pred_boxes = jax.random.uniform(k2, (bs, Q, 4), dtype=jnp.float32)
    y_preds = {'labels': logits, 'boxes': pred_boxes}

    y_true = []
    kls = jax.random.split(k3, bs)
    kbs = jax.random.split(k4, bs)
    for i, n in enumerate(n_targets):
        labels = jax.random.randint(kls[i], (n,), 0, num_classes, dtype=jnp.int32)
        boxes = jax.random.uniform(kbs[i], (n, 4), dtype=jnp.float32)
        y_true.append({'labels': labels, 'boxes': boxes})

    criterion = SetCriterion(identity_matcher, num_classes)
    out = criterion.forward(y_true, y_preds)
    out = jax.block_until_ready(out)

    # ---- plain-JAX reference check -----------------------------------------
    indices = identity_matcher(y_true, y_preds)
    batch_idx = jnp.concatenate(
        [jnp.full((n_targets[i],), i, dtype=jnp.int32) for i in range(bs)])
    src_idx = jnp.concatenate([s for s, _ in indices]).astype(jnp.int32)
    tc = jnp.full((bs, Q), num_classes, dtype=jnp.int32).at[batch_idx, src_idx].set(
        jnp.concatenate([t['labels'][j] for t, (_, j) in zip(y_true, indices)]))
    logp = jax.nn.log_softmax(logits, axis=-1)
    ce_ref = -jnp.mean(jnp.take_along_axis(logp, tc[..., None], axis=-1))
    tb = jnp.concatenate([t['boxes'][j] for t, (_, j) in zip(y_true, indices)], axis=0)
    pb = pred_boxes[batch_idx, src_idx]
    l1_ref = jnp.mean(jnp.abs(tb - pb))

    assert jnp.allclose(out['label_loss'], ce_ref, atol=1e-5), (out['label_loss'], ce_ref)
    assert jnp.allclose(out['boxes_loss'], l1_ref, atol=1e-5), (out['boxes_loss'], l1_ref)
    print("KERNEL_OK")
</pallas_src>

<mosaic_0001>
module attributes {stable_mosaic.version = 11 : i64} {
  func.func @_ce_sum_kernel(%arg0: i32, %arg1: i32, %arg2: memref<16x128xf32, #tpu.memory_space<vmem>>, %arg3: memref<16x1xi32, #tpu.memory_space<vmem>>, %arg4: memref<1x1x1xf32, #tpu.memory_space<vmem>>, %arg5: memref<1x1xf32, #tpu.memory_space<vmem>>) attributes {dimension_semantics = [#tpu.dimension_semantics<parallel>, #tpu.dimension_semantics<arbitrary>], iteration_bounds = array<i64: 2, 1>, scalar_prefetch = 0 : i64, scratch_operands = 1 : i64, tpu.core_type = #tpu.core_type<tc>, window_params = [{transform_indices = @transform_0, window_bounds = array<i64: 16, 128>}, {transform_indices = @transform_1, window_bounds = array<i64: 16, 1>}, {transform_indices = @transform_2, window_bounds = array<i64: 1, 1, 1>}]} {
    %c0_i32 = arith.constant 0 : i32
    %0 = arith.cmpi eq, %arg1, %c0_i32 : i32
    %1 = arith.extui %0 : i1 to i32
    %c0_i32_0 = arith.constant 0 : i32
    %2 = arith.cmpi ne, %1, %c0_i32_0 : i32
    scf.if %2 {
      %cst_16 = arith.constant 0.000000e+00 : f32
      %40 = vector.broadcast %cst_16 : f32 to vector<1x1xf32>
      %c0_17 = arith.constant 0 : index
      %c0_18 = arith.constant 0 : index
      %41 = vector.load %arg5[%c0_17, %c0_18] : memref<1x1xf32, #tpu.memory_space<vmem>>, vector<1x1xf32>
      tpu.vector_store %arg5[%c0_17, %c0_18], %40 {strides = array<i32>} : memref<1x1xf32, #tpu.memory_space<vmem>>, vector<1x1xf32>,
    } else {
    }
    %c0 = arith.constant 0 : index
    %c0_1 = arith.constant 0 : index
    %3 = vector.load %arg2[%c0, %c0_1] : memref<16x128xf32, #tpu.memory_space<vmem>>, vector<16x128xf32>
    %c0_2 = arith.constant 0 : index
    %c0_3 = arith.constant 0 : index
    %4 = vector.load %arg3[%c0_2, %c0_3] : memref<16x1xi32, #tpu.memory_space<vmem>>, vector<16x1xi32>
    %cst = arith.constant dense<0xFF800000> : vector<16xf32>
    %5 = vector.multi_reduction <maximumf>, %3, %cst [1] : vector<16x128xf32> to vector<16xf32>
    %6 = vector.shape_cast %5 : vector<16xf32> to vector<16x1xf32>
    %7 = vector.broadcast %6 : vector<16x1xf32> to vector<16x128xf32>
    %8 = arith.subf %3, %7 : vector<16x128xf32>
    %9 = math.exp %8 : vector<16x128xf32>
    %cst_4 = arith.constant dense<0.000000e+00> : vector<16xf32>
    %10 = vector.multi_reduction <add>, %9, %cst_4 [1] : vector<16x128xf32> to vector<16xf32>
    %11 = vector.shape_cast %10 : vector<16xf32> to vector<16x1xf32>
    %12 = math.log %11 : vector<16x1xf32>
    %13 = arith.addf %12, %6 : vector<16x1xf32>
    %14 = tpu.iota {dimensions = array<i32: 1>} : vector<16x128xi32>
    %15 = vector.broadcast %4 : vector<16x1xi32> to vector<16x128xi32>
    %16 = arith.cmpi eq, %14, %15 : vector<16x128xi32>
    %cst_5 = arith.constant 0.000000e+00 : f32
    %17 = vector.broadcast %cst_5 : f32 to vector<16x128xf32>
    %18 = arith.select %16, %3, %17 : vector<16x128xi1>, vector<16x128xf32>
    %cst_6 = arith.constant dense<0.000000e+00> : vector<16xf32>
    %19 = vector.multi_reduction <add>, %18, %cst_6 [1] : vector<16x128xf32> to vector<16xf32>
    %20 = vector.shape_cast %19 : vector<16xf32> to vector<16x1xf32>
    %21 = arith.subf %13, %20 : vector<16x1xf32>
    %22 = tpu.iota {dimensions = array<i32: 0>} : vector<16x1xi32>
    %c1_i32 = arith.constant 1 : i32
    %23 = arith.muli %arg0, %c1_i32 : i32
    %24 = arith.addi %23, %arg1 : i32
    %c16_i32 = arith.constant 16 : i32
    %25 = arith.muli %24, %c16_i32 : i32
    %26 = vector.broadcast %25 : i32 to vector<16x1xi32>
    %27 = arith.addi %26, %22 : vector<16x1xi32>
    %c16_i32_7 = arith.constant 16 : i32
    %28 = vector.broadcast %c16_i32_7 : i32 to vector<16x1xi32>
    %29 = arith.cmpi slt, %27, %28 : vector<16x1xi32>
    %cst_8 = arith.constant 0.000000e+00 : f32
    %30 = vector.broadcast %cst_8 : f32 to vector<16x1xf32>
    %31 = arith.select %29, %21, %30 : vector<16x1xi1>, vector<16x1xf32>
    %c0_9 = arith.constant 0 : index
    %c0_10 = arith.constant 0 : index
    %32 = vector.load %arg5[%c0_9, %c0_10] : memref<1x1xf32, #tpu.memory_space<vmem>>, vector<1x1xf32>
    %cst_11 = arith.constant dense<0.000000e+00> : vector<1xf32>
    %33 = vector.multi_reduction <add>, %31, %cst_11 [0] : vector<16x1xf32> to vector<1xf32>
    %34 = vector.shape_cast %33 : vector<1xf32> to vector<1x1xf32>
    %35 = arith.addf %32, %34 : vector<1x1xf32>
    %c0_12 = arith.constant 0 : index
    %c0_13 = arith.constant 0 : index
    %36 = vector.load %arg5[%c0_12, %c0_13] : memref<1x1xf32, #tpu.memory_space<vmem>>, vector<1x1xf32>
    tpu.vector_store %arg5[%c0_12, %c0_13], %35 {strides = array<i32>} : memref<1x1xf32, #tpu.memory_space<vmem>>, vector<1x1xf32>,
    %c0_i32_14 = arith.constant 0 : i32
    %37 = arith.cmpi eq, %arg1, %c0_i32_14 : i32
    %38 = arith.extui %37 : i1 to i32
    %c0_i32_15 = arith.constant 0 : i32
    %39 = arith.cmpi ne, %38, %c0_i32_15 : i32
    scf.if %39 {
      %c0_16 = arith.constant 0 : index
      %c0_17 = arith.constant 0 : index
      %40 = vector.load %arg5[%c0_16, %c0_17] : memref<1x1xf32, #tpu.memory_space<vmem>>, vector<1x1xf32>
      %41 = vector.shape_cast %40 : vector<1x1xf32> to vector<1x1x1xf32>
      %c0_18 = arith.constant 0 : index
      %c0_19 = arith.constant 0 : index
      %c0_20 = arith.constant 0 : index
      %42 = vector.load %arg4[%c0_18, %c0_19, %c0_20] : memref<1x1x1xf32, #tpu.memory_space<vmem>>, vector<1x1x1xf32>
      tpu.vector_store %arg4[%c0_18, %c0_19, %c0_20], %41 {strides = array<i32>} : memref<1x1x1xf32, #tpu.memory_space<vmem>>, vector<1x1x1xf32>,
    } else {
    }
    return
  }
  func.func @transform_0(%arg0: i32, %arg1: i32) -> (i32, i32) {
    %c1_i32 = arith.constant 1 : i32
    %0 = arith.muli %arg0, %c1_i32 : i32
    %1 = arith.addi %0, %arg1 : i32
    %c0_i32 = arith.constant 0 : i32
    %c0_i32_0 = arith.constant 0 : i32
    return %1, %c0_i32 : i32, i32
  }
  func.func @transform_1(%arg0: i32, %arg1: i32) -> (i32, i32) {
    %c1_i32 = arith.constant 1 : i32
    %0 = arith.muli %arg0, %c1_i32 : i32
    %1 = arith.addi %0, %arg1 : i32
    %c0_i32 = arith.constant 0 : i32
    %c0_i32_0 = arith.constant 0 : i32
    return %1, %c0_i32 : i32, i32
  }
  func.func @transform_2(%arg0: i32, %arg1: i32) -> (i32, i32, i32) {
    %c0_i32 = arith.constant 0 : i32
    %c0_i32_0 = arith.constant 0 : i32
    %c0_i32_1 = arith.constant 0 : i32
    return %arg0, %c0_i32, %c0_i32_0 : i32, i32, i32
  }
}

</mosaic_0001>

<llo_original>
// kernel: tpu_custom_call.1
$region0: #{tpu_custom_call.1}
  #allocation0 [shape = 'u32[]', space=smem, size = 0x4, offset = 0x4, fixed_abs, tag = 'smem constant byte address 0x4 - core index']
  #allocation1 [shape = 'u32[72,128]{1,0:T(1,128)}', space=vmem, size = 0x9000, scoped, tag = 'internal scratch']
  #allocation2 [shape = 'f32[1,1]{1,0:T(1,128)}', space=vmem, size = 0x200, scoped, tag = 'scratch operand']
  %s0 = inlined_call_operand.vmem [shape: f32[32,128], index: 0, kind: input, shape index: {}]
  %s1 = inlined_call_operand.vmem [shape: s32[32,1], index: 1, kind: input, shape index: {}]
  %s2 = inlined_call_operand.vmem [shape: f32[2,1,1], index: 2, kind: output, shape index: {}]
  %s3 = sld [smem:[#allocation0]]
  $region49: #{tpu_custom_call.1} parent=0
    _
  %s5 = ssub.s32 1, %s3
  %s6 = scalar_select 0, %s5, %s3
  loop: start=0, step=1, limit=4
  $region2: #{tpu_custom_call.1} parent=0 // loop_pre_header
    _
  $region3: #{tpu_custom_call.1} parent=0 // loop_header
    %s8 = sphi 0, %s12
    %p9 = scmp.ge.s32.totalorder %s8, 4
    %s15 = sphi 0, %s27
    %s16 = sphi 0, %s23
    %s17 = sphi 0, %s15
    %s18 = sphi 0, %s16
    %s19 = sphi 0, %s17
    %s20 = sphi 0, %s18
    %s32 = sphi 0, %s34
    %s35 = sphi 0, %s32
    %s36 = sphi 0, %s35
    %s52 = sphi 0, %s36
    %s60 = sphi 0, %s62
    %s63 = sphi 0, %s60
    %s64 = sphi 0, %s63
    %s80 = sphi 0, %s64
    %s86 = sphi 0, %s88
    %s89 = sphi 0, %s86
    %s90 = sphi 0, %s89
    %s106 = sphi 0, %s90
  $region4: #{tpu_custom_call.1} parent=0 // loop_header_branch
    %11 = sbr.rel (%p9) target = $region8
  $region5: #{tpu_custom_call.1} parent=0 // loop_body
    %s13 = ssub.s32 %s8, 1
    %s14 = ssub.s32 %s8, 2
    %s21 = sadd.s32 1, %s16
    %p22 = scmp.ge.s32.totalorder %s21, 1
    %s23 = scalar_select %p22, 0, %s21
    %s24 = sadd.s32 1, %s15
    %s25 = scalar_select %p22, %s24, %s15
    %p26 = scmp.ge.s32.totalorder %s25, 2
    %s27 = scalar_select %p26, 0, %s25
    %s28 = sadd.s32 %s15, %s16
    %s29 = sadd.s32 %s27, %s23
    %s30 = ssub.s32 %s28, %s29
    %p31 = scmp.eq.s32.totalorder %s30, 0
    %s33 = sadd.s32 %s32, 1
    %s34 = scalar_select %p31, %s32, %s33
    %p37 = pneg %p31
    %p38 = scmp.eq.s32.totalorder %s8, 1
    %p39 = por %p37, %p38
    %p40 = scmp.ne.s32.totalorder %s32, %s35
    %p41 = scmp.eq.s32.totalorder %s8, 0
    %p42 = por %p40, %p41
    %p43 = scmp.ne.s32.totalorder %s32, %s35
    %p44 = scmp.eq.s32.totalorder %s13, 1
    %p45 = por %p43, %p44
    %p46 = scmp.ne.s32.totalorder %s35, %s36
    %p47 = scmp.eq.s32.totalorder %s13, 0
    %p48 = por %p46, %p47
    %p49 = scmp.ne.s32.totalorder %s35, %s36
    %p50 = scmp.eq.s32.totalorder %s14, 1
    %p51 = por %p49, %p50
    %p53 = scmp.ne.s32.totalorder %s36, %s52
    %p54 = scmp.eq.s32.totalorder %s14, 0
    %p55 = por %p53, %p54
    %s56 = sadd.s32 %s15, %s16
    %s57 = sadd.s32 %s27, %s23
    %s58 = ssub.s32 %s56, %s57
    %p59 = scmp.eq.s32.totalorder %s58, 0
    %s61 = sadd.s32 %s60, 1
    %s62 = scalar_select %p59, %s60, %s61
    %p65 = pneg %p59
    %p66 = scmp.eq.s32.totalorder %s8, 1
    %p67 = por %p65, %p66
    %p68 = scmp.ne.s32.totalorder %s60, %s63
    %p69 = scmp.eq.s32.totalorder %s8, 0
    %p70 = por %p68, %p69
    %p71 = scmp.ne.s32.totalorder %s60, %s63
    %p72 = scmp.eq.s32.totalorder %s13, 1
    %p73 = por %p71, %p72
    %p74 = scmp.ne.s32.totalorder %s63, %s64
    %p75 = scmp.eq.s32.totalorder %s13, 0
    %p76 = por %p74, %p75
    %p77 = scmp.ne.s32.totalorder %s63, %s64
    %p78 = scmp.eq.s32.totalorder %s14, 1
    %p79 = por %p77, %p78
    %p81 = scmp.ne.s32.totalorder %s64, %s80
    %p82 = scmp.eq.s32.totalorder %s14, 0
    %p83 = por %p81, %p82
    %s84 = ssub.s32 %s15, %s27
    %p85 = scmp.eq.s32.totalorder %s84, 0
    %s87 = sadd.s32 %s86, 1
    %s88 = scalar_select %p85, %s86, %s87
    %p91 = pneg %p85
    %p92 = scmp.eq.s32.totalorder %s8, 1
    %p93 = por %p91, %p92
    %p94 = scmp.ne.s32.totalorder %s86, %s89
    %p95 = scmp.eq.s32.totalorder %s8, 0
    %p96 = por %p94, %p95
    %p97 = scmp.ne.s32.totalorder %s86, %s89
    %p98 = scmp.eq.s32.totalorder %s13, 1
    %p99 = por %p97, %p98
    %p100 = scmp.ne.s32.totalorder %s89, %s90
    %p101 = scmp.eq.s32.totalorder %s13, 0
    %p102 = por %p100, %p101
    %p103 = scmp.ne.s32.totalorder %s89, %s90
    %p104 = scmp.eq.s32.totalorder %s14, 1
    %p105 = por %p103, %p104
    %p107 = scmp.ne.s32.totalorder %s90, %s106
    %p108 = scmp.eq.s32.totalorder %s14, 0
    %p109 = por %p107, %p108
    %p110 = scmp.le.s32.totalorder 1, %s8
    %p111 = scmp.lt.s32.totalorder %s8, 3
    %p112 = pnand %p110, %p111
    %p113 = pneg %p112
    // Predicated region
    $region9: #{tpu_custom_call.1} parent=5 // pred_check
      _
    $region10: #{tpu_custom_call.1} parent=5 // pred_check_branch
      %115 = sbr.rel (%p112) target = $region12
    $region11: #{tpu_custom_call.1} parent=5 // pred_region
      %s116 = ssub.s32 %s8, 1
    $region12: #{tpu_custom_call.1} parent=5 // pred_fallthru
      _
    %p117 = scmp.lt.s32.totalorder %s8, 2
    // Predicated region
    $region13: #{tpu_custom_call.1} parent=5 // pred_check
      %p118 = pneg %p117
    $region14: #{tpu_custom_call.1} parent=5 // pred_check_branch
      %120 = sbr.rel (%p118) target = $region16
    $region15: #{tpu_custom_call.1} parent=5 // pred_region
      // Predicated region
      $region17: #{tpu_custom_call.1} parent=15 // pred_check
        %p121 = pneg %p42
      $region18: #{tpu_custom_call.1} parent=15 // pred_check_branch
        %123 = sbr.rel (%p121) target = $region20
      $region19: #{tpu_custom_call.1} parent=15 // pred_region
        %s124 = sadd.s32 %s15, %s16
        %s125 = smul.u32 2, %s124
        %p126 = scmp.lt.s32.totalorder %s125, 3
        %s127 = scalar_select %p126, %s125, 3
        %s128 = smul.addr %s127, 8
        %s129 = scalar_lea.vmem %s0, %s128
        %s130 = sadd.s32 %s15, %s16
        %s131 = smul.u32 2, %s130
      $region20: #{tpu_custom_call.1} parent=15 // pred_fallthru
        _
      // Predicated region
      $region21: #{tpu_custom_call.1} parent=15 // pred_check
        %p132 = pneg %p70
      $region22: #{tpu_custom_call.1} parent=15 // pred_check_branch
        %134 = sbr.rel (%p132) target = $region24
      $region23: #{tpu_custom_call.1} parent=15 // pred_region
        %s135 = sadd.s32 %s15, %s16
        %s136 = smul.u32 2, %s135
        %p137 = scmp.lt.s32.totalorder %s136, 3
        %s138 = scalar_select %p137, %s136, 3
        %s139 = smul.addr %s138, 8
        %s140 = scalar_lea.vmem %s1, %s139
        %s141 = sadd.s32 %s15, %s16
        %s142 = smul.u32 2, %s141
      $region24: #{tpu_custom_call.1} parent=15 // pred_fallthru
        _
    $region16: #{tpu_custom_call.1} parent=5 // pred_fallthru
      _
    %p143 = scmp.le.s32.totalorder 1, %s8
    %p144 = scmp.lt.s32.totalorder %s8, 3
    %p145 = pnand %p143, %p144
    %p146 = pneg %p145
    // Predicated region
    $region25: #{tpu_custom_call.1} parent=5 // pred_check
      _
    $region26: #{tpu_custom_call.1} parent=5 // pred_check_branch
      %148 = sbr.rel (%p145) target = $region28
    $region27: #{tpu_custom_call.1} parent=5 // pred_region
      %s149 = ssub.s32 %s8, 1
      %s150 = sadd.s32 %s17, %s18
      %s151 = smul.u32 2, %s150
      %p152 = scmp.lt.s32.totalorder %s151, 3
      %s153 = scalar_select %p152, %s151, 3
      %s154 = smul.addr %s153, 8
      %s155 = scalar_lea.vmem %s0, %s154
      %p156 = pneg %p48
      %p157 = pneg %p45
      %s158 = sadd.s32 %s17, %s18
      %s159 = smul.u32 2, %s158
      %p160 = scmp.lt.s32.totalorder %s159, 3
      %s161 = scalar_select %p160, %s159, 3
      %s162 = smul.addr %s161, 8
      %s163 = scalar_lea.vmem %s1, %s162
      %p164 = pneg %p76
      %p165 = pneg %p73
      %p166 = pneg %p102
      %p167 = pneg %p99
      %p168 = scmp.lt.s32.totalorder %s17, 1
      %s169 = scalar_select %p168, %s17, 1
      %s170 = scalar_lea.vmem %s2, %s169
      %s171 = sadd.s32 %s17, %s18
      %s172 = smul.u32 2, %s171
      %p173 = scmp.lt.s32.totalorder %s172, 3
      %s174 = scalar_select %p173, %s172, 3
      %s175 = smul.addr %s174, 8
      %s176 = scalar_lea.vmem %s0, %s175
      %s177 = sadd.s32 %s17, %s18
      %s178 = smul.u32 2, %s177
      %s179 = sadd.s32 %s17, %s18
      %s180 = smul.u32 2, %s179
      %p181 = scmp.lt.s32.totalorder %s180, 3
      %s182 = scalar_select %p181, %s180, 3
      %s183 = smul.addr %s182, 8
      %s184 = scalar_lea.vmem %s1, %s183
      %s185 = sadd.s32 %s17, %s18
      %s186 = smul.u32 2, %s185
      %p187 = scmp.lt.s32.totalorder %s17, 1
      %s188 = scalar_select %p187, %s17, 1
      %s189 = scalar_lea.vmem %s2, %s188
      %p190 = scmp.eq.s32.totalorder %s18, 0
      // Predicated region
      $region29: #{tpu_custom_call.1} parent=27 // pred_check
        %p191 = pneg %p190
      $region30: #{tpu_custom_call.1} parent=27 // pred_check_branch
        %193 = sbr.rel (%p191) target = $region32
      $region31: #{tpu_custom_call.1} parent=27 // pred_region
        %vm194 = vcmask 0
        %195 = vst.msk [vmem:[#allocation2] sm:$0x1] %vm194, 0.0
      $region32: #{tpu_custom_call.1} parent=27 // pred_fallthru
        _
      %v196 = vld [vmem:[%s176] sm:$0xff]
      %v197 = vld [vmem:[%s176 + $0x8] sm:$0xff]
      %v198 = vld [vmem:[%s184] sm:$0xff]
      %v199 = vld [vmem:[%s184 + $0x8] sm:$0xff]
      %200 = vmax.xlane.f32.xlu0 %v196
      %v201 = vpop.xlane.xlu0 %200
      %202 = vmax.xlane.f32.xlu0 %v197
      %v203 = vpop.xlane.xlu0 %202
      %v204 = vsub.f32 %v196, %v201
      %v205 = vsub.f32 %v197, %v203
      %v206 = vmul.f32 %v204, 1.442695
      %v207 = vpow.pop %v206
      %v208 = vmul.f32 %v205, 1.442695
      %v209 = vpow.pop %v208
      %210 = vadd.xlane.f32.xlu0 %v207
      %v211 = vpop.xlane.xlu0 %210
      %212 = vadd.xlane.f32.xlu0 %v209
      %v213 = vpop.xlane.xlu0 %212
      %v214 = vlog2.pop %v211
      %v215 = vmul.f32 %v214, 0.6931472
      %v216 = vlog2.pop %v213
      %v217 = vmul.f32 %v216, 0.6931472
      %v218 = vadd.f32 %v215, %v201
      %v219 = vadd.f32 %v217, %v203
      %v220 = vlaneseq
      %v221 = vand.u32 %v220, 127
      %222 = vset.pattern.permute.xlu0 0
      %223 = vperm.xlu0 %222, %v198
      %v224 = vpop.permute.xlu0 %223
      %225 = vset.pattern.permute.xlu0 0
      %226 = vperm.xlu0 %225, %v199
      %v227 = vpop.permute.xlu0 %226
      %vm228 = vcmp.eq.s32.totalorder %v221, %v224
      %vm229 = vcmp.eq.s32.totalorder %v221, %v227
      %v230 = vsel %vm228, %v196, 0.0
      %v231 = vsel %vm229, %v197, 0.0
      %232 = vadd.xlane.f32.xlu0 %v230
      %v233 = vpop.xlane.xlu0 %232
      %234 = vadd.xlane.f32.xlu0 %v231
      %v235 = vpop.xlane.xlu0 %234
      %v236 = vsub.f32 %v218, %v233
      %v237 = vsub.f32 %v219, %v235
      %v238 = vlaneseq
      %v239 = vshrl.u32 %v238, 7
      %v240 = vadd.s32 %v239, 8
      %s241 = sadd.s32 %s17, %s18
      %s242 = smul.u32 %s241, 16
      %v243 = vstv %s242
      %v244 = vadd.s32 %v243, %v239
      %v245 = vadd.s32 %v243, %v240
      %vm246 = vcmp.lt.s32.totalorder %v244, 16
      %vm247 = vcmp.lt.s32.totalorder %v245, 16
      %v248 = vsel %vm246, %v236, 0.0
      %v249 = vsel %vm247, %v237, 0.0
      %v250 = vld [vmem:[#allocation2] sm:$0x1]
      %v251 = vadd.f32 %v248, %v249
      %v252 = vrot.slane %v251, 4
      %v253 = vadd.f32 %v251, %v252
      %v254 = vrot.slane %v253, 2
      %v255 = vadd.f32 %v253, %v254
      %v256 = vrot.slane %v255, 1
      %v257 = vadd.f32 %v255, %v256
      %v258 = vadd.f32 %v250, %v257
      %vm259 = vcmask 0
      %260 = vst.msk [vmem:[#allocation2] sm:$0x1] %vm259, %v258
      // Predicated region
      $region33: #{tpu_custom_call.1} parent=27 // pred_check
        %p261 = pneg %p190
      $region34: #{tpu_custom_call.1} parent=27 // pred_check_branch
        %263 = sbr.rel (%p261) target = $region36
      $region35: #{tpu_custom_call.1} parent=27 // pred_region
        %v264 = vld [vmem:[#allocation2] sm:$0x1]
        %265 = vst.msk [vmem:[%s189] sm:$0x1] %vm259, %v264
      $region36: #{tpu_custom_call.1} parent=27 // pred_fallthru
        _
      %p266 = scmp.lt.s32.totalorder %s17, 1
      %s267 = scalar_select %p266, %s17, 1
      %s268 = scalar_lea.vmem %s2, %s267
      // Predicated region
      $region37: #{tpu_custom_call.1} parent=27 // pred_check
        %p269 = pneg %p99
      $region38: #{tpu_custom_call.1} parent=27 // pred_check_branch
        %271 = sbr.rel (%p269) target = $region40
      $region39: #{tpu_custom_call.1} parent=27 // pred_region
        _
      $region40: #{tpu_custom_call.1} parent=27 // pred_fallthru
        _
    $region28: #{tpu_custom_call.1} parent=5 // pred_fallthru
      _
    %p272 = scmp.le.s32.totalorder 2, %s8
    // Predicated region
    $region41: #{tpu_custom_call.1} parent=5 // pred_check
      %p273 = pneg %p272
    $region42: #{tpu_custom_call.1} parent=5 // pred_check_branch
      %275 = sbr.rel (%p273) target = $region44
    $region43: #{tpu_custom_call.1} parent=5 // pred_region
      %s276 = ssub.s32 %s8, 2
      // Predicated region
      $region45: #{tpu_custom_call.1} parent=43 // pred_check
        %p277 = pneg %p105
      $region46: #{tpu_custom_call.1} parent=43 // pred_check_branch
        %279 = sbr.rel (%p277) target = $region48
      $region47: #{tpu_custom_call.1} parent=43 // pred_region
        %p280 = scmp.lt.s32.totalorder %s19, 1
        %s281 = scalar_select %p280, %s19, 1
        %s282 = scalar_lea.vmem %s2, %s281
      $region48: #{tpu_custom_call.1} parent=43 // pred_fallthru
        _
    $region44: #{tpu_custom_call.1} parent=5 // pred_fallthru
      _
  $region6: #{tpu_custom_call.1} parent=0 // loop_footer
    %s12 = sadd.s32 1, %s8
  $region7: #{tpu_custom_call.1} parent=0 // loop_footer_branch
    %7 = sbr.rel target = $region3
  $region8: #{tpu_custom_call.1} parent=0 // loop_exit
    _

</llo_original>
